<compile_context>
chip_gen: v7x
topology: tpu7x:2x2x1
jax: 0.10.0
libtpu: 0.0.40
codegen_flags: <defaults>
</compile_context>

<pallas_src>
import functools
import math

import jax
import jax.numpy as jnp
from jax.experimental import pallas as pl
from jax.experimental.pallas import tpu as pltpu


def _embed_gather_kernel(tok_smem, w_hbm, o_ref, sem, *, unroll):
    """Gather `tile_t` embedding rows from HBM directly into the output block.

    tok_smem : (T_pad,) int32        token ids, scalar-prefetched into SMEM
    w_hbm    : (d_vocab, d_model)    embedding table, resident in HBM (pl.ANY)
    o_ref    : (tile_t, d_model)     pipelined output block (VMEM) -- DMA target
    sem      : scalar DMA semaphore  shared by all row copies of this tile
    """
    tile_t, _ = o_ref.shape
    d_vocab = w_hbm.shape[0]
    base = pl.program_id(0) * tile_t

    # ---- Issue phase: put all tile_t row copies in flight, no waits here ----
    @pl.loop(0, tile_t // unroll)
    def _issue(c):
        i0 = pl.multiple_of(c * unroll, unroll)
        for u in range(unroll):  # static unroll: co-issue scalar math + DMA descriptors
            i = i0 + u
            # Scalar SMEM read; clamp bad / padded-tail ids instead of an
            # unchecked OOB DMA (PyTorch would raise; documented deviation).
            tok = jnp.clip(tok_smem[base + i], 0, d_vocab - 1)
            pltpu.make_async_copy(
                w_hbm.at[pl.ds(tok, 1), :],
                o_ref.at[pl.ds(i, 1), :],
                sem,
            ).start()

    # ---- Drain phase: wait once (per row) for all outstanding copies --------
    @pl.loop(0, tile_t // unroll)
    def _drain(c):
        for _ in range(unroll):
            # Wait descriptor only needs a matching (1, d_model) size + the
            # shared semaphore; all row copies are identically sized.
            pltpu.make_async_copy(
                w_hbm.at[pl.ds(0, 1), :], o_ref.at[pl.ds(0, 1), :], sem
            ).wait()
    # No trailing o_ref[...] = ... : rows were DMA'd directly into the block.


def embed(tokens, W_E_T, *, tile_t=256, unroll=8):
    """Embedding lookup.

    tokens : int32 [batch, pos]
    W_E_T  : [d_vocab, d_model]  table in row-per-token layout (== W_E.T of the
             PyTorch parameter; store it this way at rest, never per call)
    returns [batch, pos, d_model] == rearrange(W_E[:, tokens], 'd b p -> b p d')
    """
    batch, pos = tokens.shape
    d_vocab, d_model = W_E_T.shape
    T = batch * pos
    itemsize = jnp.dtype(W_E_T.dtype).itemsize

    # Keep the double-buffered (tile_t, d_model) output block comfortably
    # inside every generation's scoped VMEM (v5e 16 MiB default scoped,
    # v6e 128 MiB physical, v7x 64 MiB physical).
    tile_t = max(8, (int(tile_t) // 8) * 8)
    while tile_t > 8 and tile_t * d_model * itemsize > 8 * 1024 * 1024:
        tile_t //= 2
    tile_t = max(8, (tile_t // 8) * 8)
    unroll = math.gcd(tile_t, max(1, int(unroll)))

    n_tiles = pl.cdiv(T, tile_t)
    T_pad = n_tiles * tile_t

    tok_flat = tokens.reshape(T).astype(jnp.int32)
    if T_pad != T:
        # Padded tail tokens gather row 0; those output rows are sliced off
        # below (prefer T divisible by tile_t to avoid the slice copy).
        tok_flat = jnp.pad(tok_flat, (0, T_pad - T))

    kernel = functools.partial(_embed_gather_kernel, unroll=unroll)

    out_flat = pl.pallas_call(
        kernel,
        out_shape=jax.ShapeDtypeStruct((T_pad, d_model), W_E_T.dtype),
        grid_spec=pltpu.PrefetchScalarGridSpec(
            num_scalar_prefetch=1,                           # tokens -> SMEM
            grid=(n_tiles,),
            in_specs=[pl.BlockSpec(memory_space=pl.ANY)],    # W_E_T stays in HBM
            out_specs=pl.BlockSpec((tile_t, d_model), lambda i, tok: (i, 0)),
            scratch_shapes=[
                pltpu.SemaphoreType.DMA,                     # one shared DMA sem
            ],
        ),
        compiler_params=pltpu.CompilerParams(
            dimension_semantics=("parallel",),               # token axis shards across TCs
            vmem_limit_bytes=32 * 1024 * 1024,
        ),
    )(tok_flat, W_E_T)

    if T_pad != T:
        out_flat = out_flat[:T]
    return out_flat.reshape(batch, pos, d_model)


def kaiming_uniform_init(key, d_model, d_vocab, a=math.sqrt(5), dtype=jnp.float32):
    # Mirrors nn.init.kaiming_uniform_(W_E, a=sqrt(5)) for a (d_model, d_vocab)
    # tensor: fan_in = d_vocab, gain = sqrt(2/(1+a^2)), bound = gain*sqrt(3/fan_in).
    gain = math.sqrt(2.0 / (1.0 + a * a))
    bound = gain * math.sqrt(3.0 / d_vocab)
    return jax.random.uniform(
        key, (d_model, d_vocab), minval=-bound, maxval=bound, dtype=dtype
    )


if __name__ == "__main__":
    cfg = {"d_model": 32, "d_vocab": 64}
    batch, pos = 2, 8

    key = jax.random.PRNGKey(0)
    k_w, k_tok = jax.random.split(key)

    # PyTorch-layout parameter (d_model, d_vocab) kept only for the reference
    # check; the kernel consumes the (d_vocab, d_model) layout, transposed ONCE
    # at parameter-creation time (not per forward call).
    W_E = kaiming_uniform_init(k_w, cfg["d_model"], cfg["d_vocab"])
    W_E_T = jnp.asarray(W_E.T)

    tokens = jax.random.randint(k_tok, (batch, pos), 0, cfg["d_vocab"], dtype=jnp.int32)

    # Small tile/unroll for the toy shape so both the grid pipeline (2 steps)
    # and the chunked issue/drain loops are exercised; real models should use
    # the defaults (tile_t=256, unroll=8).
    out = embed(tokens, W_E_T, tile_t=8, unroll=4)
    out = jax.block_until_ready(out)

    # Reference: pure-JAX equivalent of rearrange(W_E[:, tokens], 'd b p -> b p d').
    ref = jnp.transpose(W_E[:, tokens], (1, 2, 0))
    assert out.shape == (batch, pos, cfg["d_model"])
    assert jnp.allclose(out, ref), "mismatch vs reference gather"

    print("KERNEL_OK")
</pallas_src>

<mosaic_0001>
module attributes {stable_mosaic.version = 11 : i64} {
  func.func @_embed_gather_kernel(%arg0: i32, %arg1: memref<16xi32, #tpu.memory_space<smem>>, %arg2: memref<64x32xf32, #tpu.memory_space<any>>, %arg3: memref<8x32xf32, #tpu.memory_space<vmem>>, %arg4: memref<!tpu.dma_semaphore, #tpu.memory_space<semaphore_mem>>) attributes {dimension_semantics = [#tpu.dimension_semantics<parallel>], iteration_bounds = array<i64: 2>, scalar_prefetch = 1 : i64, scratch_operands = 1 : i64, tpu.core_type = #tpu.core_type<tc>, window_params = [{}, {transform_indices = @transform_1, window_bounds = array<i64: 8, 32>}]} {
    %c8_i32 = arith.constant 8 : i32
    %0 = arith.muli %arg0, %c8_i32 : i32
    %c0_i32 = arith.constant 0 : i32
    %c2_i32 = arith.constant 2 : i32
    %1 = arith.addi %c0_i32, %c2_i32 : i32
    %c1_i32 = arith.constant 1 : i32
    scf.for %arg5 = %c0_i32 to %1 step %c1_i32  : i32 {
      %c1_i32_4 = arith.constant 1 : i32
      %3 = arith.muli %arg5, %c1_i32_4 : i32
      %c0_i32_5 = arith.constant 0 : i32
      %4 = arith.addi %c0_i32_5, %3 : i32
      %c4_i32 = arith.constant 4 : i32
      %5 = arith.muli %4, %c4_i32 : i32
      %6 = tpu.assume_multiple %5, 4 : i32
      %c0_i32_6 = arith.constant 0 : i32
      %7 = arith.addi %6, %c0_i32_6 : i32
      %8 = arith.addi %0, %7 : i32
      %9 = arith.index_cast %8 : i32 to index
      %10 = memref.load %arg1[%9] : memref<16xi32, #tpu.memory_space<smem>>
      %c0_i32_7 = arith.constant 0 : i32
      %c63_i32 = arith.constant 63 : i32
      %11 = arith.maxsi %c0_i32_7, %10 : i32
      %12 = arith.minsi %c63_i32, %11 : i32
      %c0_i32_8 = arith.constant 0 : i32
      %13 = tpu.memref_slice %arg2[%12, %c0_i32_8] : memref<64x32xf32, #tpu.memory_space<any>> -> memref<1x32xf32, #tpu.memory_space<any>>
      %c0_i32_9 = arith.constant 0 : i32
      %14 = tpu.memref_slice %arg3[%7, %c0_i32_9] : memref<8x32xf32, #tpu.memory_space<vmem>> -> memref<1x32xf32, #tpu.memory_space<vmem>>
      tpu.enqueue_dma source(%13 : memref<1x32xf32, #tpu.memory_space<any>>) target(%14 : memref<1x32xf32, #tpu.memory_space<vmem>>) target_semaphore(%arg4 : memref<!tpu.dma_semaphore, #tpu.memory_space<semaphore_mem>>)
      %c1_i32_10 = arith.constant 1 : i32
      %15 = arith.addi %6, %c1_i32_10 : i32
      %16 = arith.addi %0, %15 : i32
      %17 = arith.index_cast %16 : i32 to index
      %18 = memref.load %arg1[%17] : memref<16xi32, #tpu.memory_space<smem>>
      %c0_i32_11 = arith.constant 0 : i32
      %c63_i32_12 = arith.constant 63 : i32
      %19 = arith.maxsi %c0_i32_11, %18 : i32
      %20 = arith.minsi %c63_i32_12, %19 : i32
      %c0_i32_13 = arith.constant 0 : i32
      %21 = tpu.memref_slice %arg2[%20, %c0_i32_13] : memref<64x32xf32, #tpu.memory_space<any>> -> memref<1x32xf32, #tpu.memory_space<any>>
      %c0_i32_14 = arith.constant 0 : i32
      %22 = tpu.memref_slice %arg3[%15, %c0_i32_14] : memref<8x32xf32, #tpu.memory_space<vmem>> -> memref<1x32xf32, #tpu.memory_space<vmem>>
      tpu.enqueue_dma source(%21 : memref<1x32xf32, #tpu.memory_space<any>>) target(%22 : memref<1x32xf32, #tpu.memory_space<vmem>>) target_semaphore(%arg4 : memref<!tpu.dma_semaphore, #tpu.memory_space<semaphore_mem>>)
      %c2_i32_15 = arith.constant 2 : i32
      %23 = arith.addi %6, %c2_i32_15 : i32
      %24 = arith.addi %0, %23 : i32
      %25 = arith.index_cast %24 : i32 to index
      %26 = memref.load %arg1[%25] : memref<16xi32, #tpu.memory_space<smem>>
      %c0_i32_16 = arith.constant 0 : i32
      %c63_i32_17 = arith.constant 63 : i32
      %27 = arith.maxsi %c0_i32_16, %26 : i32
      %28 = arith.minsi %c63_i32_17, %27 : i32
      %c0_i32_18 = arith.constant 0 : i32
      %29 = tpu.memref_slice %arg2[%28, %c0_i32_18] : memref<64x32xf32, #tpu.memory_space<any>> -> memref<1x32xf32, #tpu.memory_space<any>>
      %c0_i32_19 = arith.constant 0 : i32
      %30 = tpu.memref_slice %arg3[%23, %c0_i32_19] : memref<8x32xf32, #tpu.memory_space<vmem>> -> memref<1x32xf32, #tpu.memory_space<vmem>>
      tpu.enqueue_dma source(%29 : memref<1x32xf32, #tpu.memory_space<any>>) target(%30 : memref<1x32xf32, #tpu.memory_space<vmem>>) target_semaphore(%arg4 : memref<!tpu.dma_semaphore, #tpu.memory_space<semaphore_mem>>)
      %c3_i32 = arith.constant 3 : i32
      %31 = arith.addi %6, %c3_i32 : i32
      %32 = arith.addi %0, %31 : i32
      %33 = arith.index_cast %32 : i32 to index
      %34 = memref.load %arg1[%33] : memref<16xi32, #tpu.memory_space<smem>>
      %c0_i32_20 = arith.constant 0 : i32
      %c63_i32_21 = arith.constant 63 : i32
      %35 = arith.maxsi %c0_i32_20, %34 : i32
      %36 = arith.minsi %c63_i32_21, %35 : i32
      %c0_i32_22 = arith.constant 0 : i32
      %37 = tpu.memref_slice %arg2[%36, %c0_i32_22] : memref<64x32xf32, #tpu.memory_space<any>> -> memref<1x32xf32, #tpu.memory_space<any>>
      %c0_i32_23 = arith.constant 0 : i32
      %38 = tpu.memref_slice %arg3[%31, %c0_i32_23] : memref<8x32xf32, #tpu.memory_space<vmem>> -> memref<1x32xf32, #tpu.memory_space<vmem>>
      tpu.enqueue_dma source(%37 : memref<1x32xf32, #tpu.memory_space<any>>) target(%38 : memref<1x32xf32, #tpu.memory_space<vmem>>) target_semaphore(%arg4 : memref<!tpu.dma_semaphore, #tpu.memory_space<semaphore_mem>>)
    }
    %c2_i32_0 = arith.constant 2 : i32
    %c0_i32_1 = arith.constant 0 : i32
    %c2_i32_2 = arith.constant 2 : i32
    %2 = arith.addi %c0_i32_1, %c2_i32_2 : i32
    %c1_i32_3 = arith.constant 1 : i32
    scf.for %arg5 = %c0_i32_1 to %2 step %c1_i32_3  : i32 {
      %c0_i32_4 = arith.constant 0 : i32
      %c0_i32_5 = arith.constant 0 : i32
      %3 = tpu.memref_slice %arg2[%c0_i32_4, %c0_i32_5] : memref<64x32xf32, #tpu.memory_space<any>> -> memref<1x32xf32, #tpu.memory_space<any>>
      %c0_i32_6 = arith.constant 0 : i32
      %c0_i32_7 = arith.constant 0 : i32
      %4 = tpu.memref_slice %arg3[%c0_i32_6, %c0_i32_7] : memref<8x32xf32, #tpu.memory_space<vmem>> -> memref<1x32xf32, #tpu.memory_space<vmem>>
      tpu.wait_dma2 semaphore(%arg4 : memref<!tpu.dma_semaphore, #tpu.memory_space<semaphore_mem>>) src(%3 : memref<1x32xf32, #tpu.memory_space<any>>) dst(%4 : memref<1x32xf32, #tpu.memory_space<vmem>>)
      %c0_i32_8 = arith.constant 0 : i32
      %c0_i32_9 = arith.constant 0 : i32
      %5 = tpu.memref_slice %arg2[%c0_i32_8, %c0_i32_9] : memref<64x32xf32, #tpu.memory_space<any>> -> memref<1x32xf32, #tpu.memory_space<any>>
      %c0_i32_10 = arith.constant 0 : i32
      %c0_i32_11 = arith.constant 0 : i32
      %6 = tpu.memref_slice %arg3[%c0_i32_10, %c0_i32_11] : memref<8x32xf32, #tpu.memory_space<vmem>> -> memref<1x32xf32, #tpu.memory_space<vmem>>
      tpu.wait_dma2 semaphore(%arg4 : memref<!tpu.dma_semaphore, #tpu.memory_space<semaphore_mem>>) src(%5 : memref<1x32xf32, #tpu.memory_space<any>>) dst(%6 : memref<1x32xf32, #tpu.memory_space<vmem>>)
      %c0_i32_12 = arith.constant 0 : i32
      %c0_i32_13 = arith.constant 0 : i32
      %7 = tpu.memref_slice %arg2[%c0_i32_12, %c0_i32_13] : memref<64x32xf32, #tpu.memory_space<any>> -> memref<1x32xf32, #tpu.memory_space<any>>
      %c0_i32_14 = arith.constant 0 : i32
      %c0_i32_15 = arith.constant 0 : i32
      %8 = tpu.memref_slice %arg3[%c0_i32_14, %c0_i32_15] : memref<8x32xf32, #tpu.memory_space<vmem>> -> memref<1x32xf32, #tpu.memory_space<vmem>>
      tpu.wait_dma2 semaphore(%arg4 : memref<!tpu.dma_semaphore, #tpu.memory_space<semaphore_mem>>) src(%7 : memref<1x32xf32, #tpu.memory_space<any>>) dst(%8 : memref<1x32xf32, #tpu.memory_space<vmem>>)
      %c0_i32_16 = arith.constant 0 : i32
      %c0_i32_17 = arith.constant 0 : i32
      %9 = tpu.memref_slice %arg2[%c0_i32_16, %c0_i32_17] : memref<64x32xf32, #tpu.memory_space<any>> -> memref<1x32xf32, #tpu.memory_space<any>>
      %c0_i32_18 = arith.constant 0 : i32
      %c0_i32_19 = arith.constant 0 : i32
      %10 = tpu.memref_slice %arg3[%c0_i32_18, %c0_i32_19] : memref<8x32xf32, #tpu.memory_space<vmem>> -> memref<1x32xf32, #tpu.memory_space<vmem>>
      tpu.wait_dma2 semaphore(%arg4 : memref<!tpu.dma_semaphore, #tpu.memory_space<semaphore_mem>>) src(%9 : memref<1x32xf32, #tpu.memory_space<any>>) dst(%10 : memref<1x32xf32, #tpu.memory_space<vmem>>)
    }
    return
  }
  func.func @transform_1(%arg0: i32, %arg1: memref<16xi32, #tpu.memory_space<smem>>) -> (i32, i32) {
    %c0_i32 = arith.constant 0 : i32
    %c0_i32_0 = arith.constant 0 : i32
    return %arg0, %c0_i32 : i32, i32
  }
}

</mosaic_0001>

<llo_original>
// kernel: tpu_custom_call.1
$region0: #{tpu_custom_call.1}
  #allocation0 [shape = 'u32[]', space=smem, size = 0x4, offset = 0x4, fixed_abs, tag = 'smem constant byte address 0x4 - core index']
  #allocation1 [shape = 'u32[144,128]{1,0:T(1,128)}', space=vmem, size = 0x12000, scoped, tag = 'internal scratch']
  #allocation2 [shape = 's32[1]{0}', space=sflag, size = 0x4, scoped, tag = 'scratch operand']
  #allocation3 [shape = 's32[1]{0}', space=sflag, size = 0x4, scoped, tag = 'scoped memory for tpu_custom_call.1']
  #allocation4 [shape = 'u8[512]{0}', space=smem, size = 0x200, scoped, tag = 'prefetched SMEM operand 0']
  #allocation7 [shape = 's32[]', space=sflag, size = 0x4, offset = 0, fixed_abs, tag = 'sflag constant byte address 0x0 - dummy sync flag']
  #allocation8 [shape = 's32[]', space=sflag, size = 0x4, offset = 0, fixed_abs, tag = 'sflag constant byte address 0x0 - dummy sync flag']
  #allocation9 [shape = 's32[]', space=sflag, size = 0x4, offset = 0, fixed_abs, tag = 'sflag constant byte address 0x0 - dummy sync flag']
  #allocation10 [shape = 's32[]', space=sflag, size = 0x4, offset = 0, fixed_abs, tag = 'sflag constant byte address 0x0 - dummy sync flag']
  %s0 = inlined_call_operand.vmem [shape: s32[16], index: 0, kind: input, shape index: {}]
  %s1 = inlined_call_operand.vmem [shape: f32[64,32], index: 1, kind: input, shape index: {}]
  %s2 = inlined_call_operand.hbm [shape: f32[16,32], index: 2, kind: output, shape index: {}]
  %s3 = sld [smem:[#allocation0]]
  $region159: #{tpu_custom_call.1} parent=0
    _
  %s5 = ssub.s32 1, %s3
  %s6 = scalar_select 0, %s5, %s3
  %s7 = sshll.u32 %s0, 4
  %s8 = int_to_ptr.vmem [resolvable:$true] %s7
  %10 = dma.vmem_to_smem %s8, 16, [#allocation4], [#allocation3]
  %11 = dma.done [#allocation3], 16
  %12 = sfence
  $region1: #{tpu_custom_call.1} parent=0
    #allocation5 [shape = 'u8[8192]{0}', space=vmem, size = 0x2000, scoped, tag = 'output window, operand 0']
    #allocation6 [shape = 's32[2]{0}', space=sflag, size = 0x8, scoped, tag = 'scoped memory for tpu_custom_call.1']
    %13 = vsyncpa [#allocation6], 0
    %s14 = scalar_lea.sflag [#allocation6], 1
    %15 = vsyncpa %s14, 0
    loop: start=0, step=1, limit=3
    $region2: #{tpu_custom_call.1} parent=1 // loop_pre_header
      _
    $region3: #{tpu_custom_call.1} parent=1 // loop_header
      %s17 = sphi 0, %s21
      %p18 = scmp.ge.s32.totalorder %s17, 3
      %s26 = sphi 0, %s28
      %s29 = sphi 0, %s26
      %s39 = sphi 0, %s29
    $region4: #{tpu_custom_call.1} parent=1 // loop_header_branch
      %20 = sbr.rel (%p18) target = $region8
    $region5: #{tpu_custom_call.1} parent=1 // loop_body
      %s22 = ssub.s32 %s17, 1
      %s23 = sadd.s32 %s17, 1
      %s24 = ssub.s32 %s17, %s23
      %p25 = scmp.eq.s32.totalorder %s24, 0
      %s27 = sadd.s32 %s26, 1
      %s28 = scalar_select %p25, %s26, %s27
      %p30 = pneg %p25
      %p31 = scmp.eq.s32.totalorder %s17, 1
      %p32 = por %p30, %p31
      %p33 = scmp.ne.s32.totalorder %s26, %s29
      %p34 = scmp.eq.s32.totalorder %s17, 0
      %p35 = por %p33, %p34
      %p36 = scmp.ne.s32.totalorder %s26, %s29
      %p37 = scmp.eq.s32.totalorder %s22, 1
      %p38 = por %p36, %p37
      %p40 = scmp.ne.s32.totalorder %s29, %s39
      %p41 = scmp.eq.s32.totalorder %s22, 0
      %p42 = por %p40, %p41
      %p43 = scmp.lt.s32.totalorder %s17, 2
      // Predicated region
      $region9: #{tpu_custom_call.1} parent=5 // pred_check
        %p44 = pneg %p43
      $region10: #{tpu_custom_call.1} parent=5 // pred_check_branch
        %46 = sbr.rel (%p44) target = $region12
      $region11: #{tpu_custom_call.1} parent=5 // pred_region
        %p47 = pneg %p35
        %p48 = pneg %p32
        %s49 = sand.u32 %s26, 1
        %s50 = scalar_lea.sflag [#allocation6], %s49
        %s51 = sand.u32 %s26, 1
        %s52 = smul.addr %s51, 8
        %s53 = scalar_lea.vmem [#allocation5], %s52
        %s54 = smul.u32 %s17, 8
        loop: start=0, step=1, limit=2
        $region13: #{tpu_custom_call.1} parent=11 // loop_pre_header
          _
        $region14: #{tpu_custom_call.1} parent=11 // loop_header
          %s56 = sphi 0, %s60
          %p57 = scmp.ge.s32.totalorder %s56, 2
        $region15: #{tpu_custom_call.1} parent=11 // loop_header_branch
          %59 = sbr.rel (%p57) target = $region19
        $region16: #{tpu_custom_call.1} parent=11 // loop_body
          %s61 = smul.u32 %s56, 4
          %s62 = sadd.s32 %s54, %s61
          %s63 = sld [smem:[#allocation4 + %s62]]
          %p64 = scmp.gt.s32.totalorder %s63, 0
          %s65 = scalar_select %p64, %s63, 0
          %p66 = scmp.lt.s32.totalorder %s65, 63
          %s67 = scalar_select %p66, %s65, 63
          %s68 = scalar_lea.vmem %s1, %s67
          %s69 = scalar_lea.vmem %s53, %s61 [#allocation5]
          %p71 = scmp.lt.u32.totalorder 1, 8
          %p72 = pneg %p71
          // Predicated region
          $region20: #{tpu_custom_call.1} parent=16 // pred_check
            _
          $region21: #{tpu_custom_call.1} parent=16 // pred_check_branch
            %74 = sbr.rel (%p71) target = $region23
          $region22: #{tpu_custom_call.1} parent=16 // pred_region
            %s89 = sand.u32 1, 7
            %p90 = scmp.eq.s32.totalorder %s89, 0
            %p91 = pneg %p90
            // Predicated region
            $region35: #{tpu_custom_call.1} parent=22 // pred_check
              _
            $region36: #{tpu_custom_call.1} parent=22 // pred_check_branch
              %93 = sbr.rel (%p90) target = $region38
            $region37: #{tpu_custom_call.1} parent=22 // pred_region
              %s94 = sand.u32 1, 7
              %s95 = ssub.s32 1, %s94
              %s96 = scalar_lea.vmem %s68, %s95
              %s97 = ssub.s32 1, %s94
              %s98 = scalar_lea.vmem %s69, %s97 [#allocation5]
              %s99 = sshllo.u32 0, %s94
              loop: start=0, step=1, limit=1
              $region39: #{tpu_custom_call.1} parent=37 // loop_pre_header
                _
              $region40: #{tpu_custom_call.1} parent=37 // loop_header
                %s101 = sphi 0, %s105
                %p102 = scmp.ge.s32.totalorder %s101, 1
                %s106 = sphi %s96, %s96
                %s107 = sphi %s98, %s98
              $region41: #{tpu_custom_call.1} parent=37 // loop_header_branch
                %104 = sbr.rel (%p102) target = $region45
              $region42: #{tpu_custom_call.1} parent=37 // loop_body
                %v108 = vld [vmem:[%s106] sm:%s99]
                %109 = vst [vmem:[%s107] sm:%s99] %v108
              $region43: #{tpu_custom_call.1} parent=37 // loop_footer
                %s105 = sadd.s32 1, %s101
              $region44: #{tpu_custom_call.1} parent=37 // loop_footer_branch
                %100 = sbr.rel target = $region40
              $region45: #{tpu_custom_call.1} parent=37 // loop_exit
                _
            $region38: #{tpu_custom_call.1} parent=22 // pred_fallthru
              _
          $region23: #{tpu_custom_call.1} parent=16 // pred_fallthru
            _
          // Predicated region
          $region24: #{tpu_custom_call.1} parent=16 // pred_check
            %p75 = pneg %p71
          $region25: #{tpu_custom_call.1} parent=16 // pred_check_branch
            %77 = sbr.rel (%p75) target = $region27
          $region26: #{tpu_custom_call.1} parent=16 // pred_region
            %s78 = sshllo.u32 0, 1
            loop: start=0, step=1, limit=1
            $region28: #{tpu_custom_call.1} parent=26 // loop_pre_header
              _
            $region29: #{tpu_custom_call.1} parent=26 // loop_header
              %s80 = sphi 0, %s84
              %p81 = scmp.ge.s32.totalorder %s80, 1
              %s85 = sphi %s68, %s68
              %s86 = sphi %s69, %s69
            $region30: #{tpu_custom_call.1} parent=26 // loop_header_branch
              %83 = sbr.rel (%p81) target = $region34
            $region31: #{tpu_custom_call.1} parent=26 // loop_body
              %v87 = vld [vmem:[%s85] sm:%s78]
              %88 = vst [vmem:[%s86] sm:%s78] %v87
            $region32: #{tpu_custom_call.1} parent=26 // loop_footer
              %s84 = sadd.s32 1, %s80
            $region33: #{tpu_custom_call.1} parent=26 // loop_footer_branch
              %79 = sbr.rel target = $region29
            $region34: #{tpu_custom_call.1} parent=26 // loop_exit
              _
          $region27: #{tpu_custom_call.1} parent=16 // pred_fallthru
            _
          // Predicated region
          $region46: #{tpu_custom_call.1} parent=16 // pred_check
            _
          $region47: #{tpu_custom_call.1} parent=16 // pred_check_branch
            %112 = sbr.rel (0) target = $region49
          $region48: #{tpu_custom_call.1} parent=16 // pred_region
            %113 = vsyncadd [#allocation2], 16
          $region49: #{tpu_custom_call.1} parent=16 // pred_fallthru
            _
          %s114 = sadd.s32 %s61, 1
          %s115 = sadd.s32 %s54, %s114
          %s116 = sld [smem:[#allocation4 + %s115]]
          %p117 = scmp.gt.s32.totalorder %s116, 0
          %s118 = scalar_select %p117, %s116, 0
          %p119 = scmp.lt.s32.totalorder %s118, 63
          %s120 = scalar_select %p119, %s118, 63
          %s121 = scalar_lea.vmem %s1, %s120
          %s122 = scalar_lea.vmem %s53, %s114 [#allocation5]
          %p124 = scmp.lt.u32.totalorder 1, 8
          %p125 = pneg %p124
          // Predicated region
          $region50: #{tpu_custom_call.1} parent=16 // pred_check
            _
          $region51: #{tpu_custom_call.1} parent=16 // pred_check_branch
            %127 = sbr.rel (%p124) target = $region53
          $region52: #{tpu_custom_call.1} parent=16 // pred_region
            %s142 = sand.u32 1, 7
            %p143 = scmp.eq.s32.totalorder %s142, 0
            %p144 = pneg %p143
            // Predicated region
            $region65: #{tpu_custom_call.1} parent=52 // pred_check
              _
            $region66: #{tpu_custom_call.1} parent=52 // pred_check_branch
              %146 = sbr.rel (%p143) target = $region68
            $region67: #{tpu_custom_call.1} parent=52 // pred_region
              %s147 = sand.u32 1, 7
              %s148 = ssub.s32 1, %s147
              %s149 = scalar_lea.vmem %s121, %s148
              %s150 = ssub.s32 1, %s147
              %s151 = scalar_lea.vmem %s122, %s150 [#allocation5]
              %s152 = sshllo.u32 0, %s147
              loop: start=0, step=1, limit=1
              $region69: #{tpu_custom_call.1} parent=67 // loop_pre_header
                _
              $region70: #{tpu_custom_call.1} parent=67 // loop_header
                %s154 = sphi 0, %s158
                %p155 = scmp.ge.s32.totalorder %s154, 1
                %s159 = sphi %s149, %s149
                %s160 = sphi %s151, %s151
              $region71: #{tpu_custom_call.1} parent=67 // loop_header_branch
                %157 = sbr.rel (%p155) target = $region75
              $region72: #{tpu_custom_call.1} parent=67 // loop_body
                %v161 = vld [vmem:[%s159] sm:%s152]
                %162 = vst [vmem:[%s160] sm:%s152] %v161
              $region73: #{tpu_custom_call.1} parent=67 // loop_footer
                %s158 = sadd.s32 1, %s154
              $region74: #{tpu_custom_call.1} parent=67 // loop_footer_branch
                %153 = sbr.rel target = $region70
              $region75: #{tpu_custom_call.1} parent=67 // loop_exit
                _
            $region68: #{tpu_custom_call.1} parent=52 // pred_fallthru
              _
          $region53: #{tpu_custom_call.1} parent=16 // pred_fallthru
            _
          // Predicated region
          $region54: #{tpu_custom_call.1} parent=16 // pred_check
            %p128 = pneg %p124
          $region55: #{tpu_custom_call.1} parent=16 // pred_check_branch
            %130 = sbr.rel (%p128) target = $region57
          $region56: #{tpu_custom_call.1} parent=16 // pred_region
            %s131 = sshllo.u32 0, 1
            loop: start=0, step=1, limit=1
            $region58: #{tpu_custom_call.1} parent=56 // loop_pre_header
              _
            $region59: #{tpu_custom_call.1} parent=56 // loop_header
              %s133 = sphi 0, %s137
              %p134 = scmp.ge.s32.totalorder %s133, 1
              %s138 = sphi %s121, %s121
              %s139 = sphi %s122, %s122
            $region60: #{tpu_custom_call.1} parent=56 // loop_header_branch
              %136 = sbr.rel (%p134) target = $region64
            $region61: #{tpu_custom_call.1} parent=56 // loop_body
              %v140 = vld [vmem:[%s138] sm:%s131]
              %141 = vst [vmem:[%s139] sm:%s131] %v140
            $region62: #{tpu_custom_call.1} parent=56 // loop_footer
              %s137 = sadd.s32 1, %s133
            $region63: #{tpu_custom_call.1} parent=56 // loop_footer_branch
              %132 = sbr.rel target = $region59
            $region64: #{tpu_custom_call.1} parent=56 // loop_exit
              _
          $region57: #{tpu_custom_call.1} parent=16 // pred_fallthru
            _
          // Predicated region
          $region76: #{tpu_custom_call.1} parent=16 // pred_check
            _
          $region77: #{tpu_custom_call.1} parent=16 // pred_check_branch
            %165 = sbr.rel (0) target = $region79
          $region78: #{tpu_custom_call.1} parent=16 // pred_region
            %166 = vsyncadd [#allocation2], 16
          $region79: #{tpu_custom_call.1} parent=16 // pred_fallthru
            _
          %s167 = sadd.s32 %s61, 2
          %s168 = sadd.s32 %s54, %s167
          %s169 = sld [smem:[#allocation4 + %s168]]
          %p170 = scmp.gt.s32.totalorder %s169, 0
          %s171 = scalar_select %p170, %s169, 0
          %p172 = scmp.lt.s32.totalorder %s171, 63
          %s173 = scalar_select %p172, %s171, 63
          %s174 = scalar_lea.vmem %s1, %s173
          %s175 = scalar_lea.vmem %s53, %s167 [#allocation5]
          %p177 = scmp.lt.u32.totalorder 1, 8
          %p178 = pneg %p177
          // Predicated region
          $region80: #{tpu_custom_call.1} parent=16 // pred_check
            _
          $region81: #{tpu_custom_call.1} parent=16 // pred_check_branch
            %180 = sbr.rel (%p177) target = $region83
          $region82: #{tpu_custom_call.1} parent=16 // pred_region
            %s195 = sand.u32 1, 7
            %p196 = scmp.eq.s32.totalorder %s195, 0
            %p197 = pneg %p196
            // Predicated region
            $region95: #{tpu_custom_call.1} parent=82 // pred_check
              _
            $region96: #{tpu_custom_call.1} parent=82 // pred_check_branch
              %199 = sbr.rel (%p196) target = $region98
            $region97: #{tpu_custom_call.1} parent=82 // pred_region
              %s200 = sand.u32 1, 7
              %s201 = ssub.s32 1, %s200
              %s202 = scalar_lea.vmem %s174, %s201
              %s203 = ssub.s32 1, %s200
              %s204 = scalar_lea.vmem %s175, %s203 [#allocation5]
              %s205 = sshllo.u32 0, %s200
              loop: start=0, step=1, limit=1
              $region99: #{tpu_custom_call.1} parent=97 // loop_pre_header
                _
              $region100: #{tpu_custom_call.1} parent=97 // loop_header
                %s207 = sphi 0, %s211
                %p208 = scmp.ge.s32.totalorder %s207, 1
                %s212 = sphi %s202, %s202
                %s213 = sphi %s204, %s204
              $region101: #{tpu_custom_call.1} parent=97 // loop_header_branch
                %210 = sbr.rel (%p208) target = $region105
              $region102: #{tpu_custom_call.1} parent=97 // loop_body
                %v214 = vld [vmem:[%s212] sm:%s205]
                %215 = vst [vmem:[%s213] sm:%s205] %v214
              $region103: #{tpu_custom_call.1} parent=97 // loop_footer
                %s211 = sadd.s32 1, %s207
              $region104: #{tpu_custom_call.1} parent=97 // loop_footer_branch
                %206 = sbr.rel target = $region100
              $region105: #{tpu_custom_call.1} parent=97 // loop_exit
                _
            $region98: #{tpu_custom_call.1} parent=82 // pred_fallthru
              _
          $region83: #{tpu_custom_call.1} parent=16 // pred_fallthru
            _
          // Predicated region
          $region84: #{tpu_custom_call.1} parent=16 // pred_check
            %p181 = pneg %p177
          $region85: #{tpu_custom_call.1} parent=16 // pred_check_branch
            %183 = sbr.rel (%p181) target = $region87
          $region86: #{tpu_custom_call.1} parent=16 // pred_region
            %s184 = sshllo.u32 0, 1
            loop: start=0, step=1, limit=1
            $region88: #{tpu_custom_call.1} parent=86 // loop_pre_header
              _
            $region89: #{tpu_custom_call.1} parent=86 // loop_header
              %s186 = sphi 0, %s190
              %p187 = scmp.ge.s32.totalorder %s186, 1
              %s191 = sphi %s174, %s174
              %s192 = sphi %s175, %s175
            $region90: #{tpu_custom_call.1} parent=86 // loop_header_branch
              %189 = sbr.rel (%p187) target = $region94
            $region91: #{tpu_custom_call.1} parent=86 // loop_body
              %v193 = vld [vmem:[%s191] sm:%s184]
              %194 = vst [vmem:[%s192] sm:%s184] %v193
            $region92: #{tpu_custom_call.1} parent=86 // loop_footer
              %s190 = sadd.s32 1, %s186
            $region93: #{tpu_custom_call.1} parent=86 // loop_footer_branch
              %185 = sbr.rel target = $region89
            $region94: #{tpu_custom_call.1} parent=86 // loop_exit
              _
          $region87: #{tpu_custom_call.1} parent=16 // pred_fallthru
            _
          // Predicated region
          $region106: #{tpu_custom_call.1} parent=16 // pred_check
            _
          $region107: #{tpu_custom_call.1} parent=16 // pred_check_branch
            %218 = sbr.rel (0) target = $region109
          $region108: #{tpu_custom_call.1} parent=16 // pred_region
            %219 = vsyncadd [#allocation2], 16
          $region109: #{tpu_custom_call.1} parent=16 // pred_fallthru
            _
          %s220 = sadd.s32 %s61, 3
          %s221 = sadd.s32 %s54, %s220
          %s222 = sld [smem:[#allocation4 + %s221]]
          %p223 = scmp.gt.s32.totalorder %s222, 0
          %s224 = scalar_select %p223, %s222, 0
          %p225 = scmp.lt.s32.totalorder %s224, 63
          %s226 = scalar_select %p225, %s224, 63
          %s227 = scalar_lea.vmem %s1, %s226
          %s228 = scalar_lea.vmem %s53, %s220 [#allocation5]
          %p230 = scmp.lt.u32.totalorder 1, 8
          %p231 = pneg %p230
          // Predicated region
          $region110: #{tpu_custom_call.1} parent=16 // pred_check
            _
          $region111: #{tpu_custom_call.1} parent=16 // pred_check_branch
            %233 = sbr.rel (%p230) target = $region113
          $region112: #{tpu_custom_call.1} parent=16 // pred_region
            %s248 = sand.u32 1, 7
            %p249 = scmp.eq.s32.totalorder %s248, 0
            %p250 = pneg %p249
            // Predicated region
            $region125: #{tpu_custom_call.1} parent=112 // pred_check
              _
            $region126: #{tpu_custom_call.1} parent=112 // pred_check_branch
              %252 = sbr.rel (%p249) target = $region128
            $region127: #{tpu_custom_call.1} parent=112 // pred_region
              %s253 = sand.u32 1, 7
              %s254 = ssub.s32 1, %s253
              %s255 = scalar_lea.vmem %s227, %s254
              %s256 = ssub.s32 1, %s253
              %s257 = scalar_lea.vmem %s228, %s256 [#allocation5]
              %s258 = sshllo.u32 0, %s253
              loop: start=0, step=1, limit=1
              $region129: #{tpu_custom_call.1} parent=127 // loop_pre_header
                _
              $region130: #{tpu_custom_call.1} parent=127 // loop_header
                %s260 = sphi 0, %s264
                %p261 = scmp.ge.s32.totalorder %s260, 1
                %s265 = sphi %s255, %s255
                %s266 = sphi %s257, %s257
              $region131: #{tpu_custom_call.1} parent=127 // loop_header_branch
                %263 = sbr.rel (%p261) target = $region135
              $region132: #{tpu_custom_call.1} parent=127 // loop_body
                %v267 = vld [vmem:[%s265] sm:%s258]
                %268 = vst [vmem:[%s266] sm:%s258] %v267
              $region133: #{tpu_custom_call.1} parent=127 // loop_footer
                %s264 = sadd.s32 1, %s260
              $region134: #{tpu_custom_call.1} parent=127 // loop_footer_branch
                %259 = sbr.rel target = $region130
              $region135: #{tpu_custom_call.1} parent=127 // loop_exit
                _
            $region128: #{tpu_custom_call.1} parent=112 // pred_fallthru
              _
          $region113: #{tpu_custom_call.1} parent=16 // pred_fallthru
            _
          // Predicated region
          $region114: #{tpu_custom_call.1} parent=16 // pred_check
            %p234 = pneg %p230
          $region115: #{tpu_custom_call.1} parent=16 // pred_check_branch
            %236 = sbr.rel (%p234) target = $region117
          $region116: #{tpu_custom_call.1} parent=16 // pred_region
            %s237 = sshllo.u32 0, 1
            loop: start=0, step=1, limit=1
            $region118: #{tpu_custom_call.1} parent=116 // loop_pre_header
              _
            $region119: #{tpu_custom_call.1} parent=116 // loop_header
              %s239 = sphi 0, %s243
              %p240 = scmp.ge.s32.totalorder %s239, 1
              %s244 = sphi %s227, %s227
              %s245 = sphi %s228, %s228
            $region120: #{tpu_custom_call.1} parent=116 // loop_header_branch
              %242 = sbr.rel (%p240) target = $region124
            $region121: #{tpu_custom_call.1} parent=116 // loop_body
              %v246 = vld [vmem:[%s244] sm:%s237]
              %247 = vst [vmem:[%s245] sm:%s237] %v246
            $region122: #{tpu_custom_call.1} parent=116 // loop_footer
              %s243 = sadd.s32 1, %s239
            $region123: #{tpu_custom_call.1} parent=116 // loop_footer_branch
              %238 = sbr.rel target = $region119
            $region124: #{tpu_custom_call.1} parent=116 // loop_exit
              _
          $region117: #{tpu_custom_call.1} parent=16 // pred_fallthru
            _
          // Predicated region
          $region136: #{tpu_custom_call.1} parent=16 // pred_check
            _
          $region137: #{tpu_custom_call.1} parent=16 // pred_check_branch
            %271 = sbr.rel (0) target = $region139
          $region138: #{tpu_custom_call.1} parent=16 // pred_region
            %272 = vsyncadd [#allocation2], 16
          $region139: #{tpu_custom_call.1} parent=16 // pred_fallthru
            _
        $region17: #{tpu_custom_call.1} parent=11 // loop_footer
          %s60 = sadd.s32 1, %s56
        $region18: #{tpu_custom_call.1} parent=11 // loop_footer_branch
          %55 = sbr.rel target = $region14
        $region19: #{tpu_custom_call.1} parent=11 // loop_exit
          _
        loop: start=0, step=1, limit=2
        $region140: #{tpu_custom_call.1} parent=11 // loop_pre_header
          _
        $region141: #{tpu_custom_call.1} parent=11 // loop_header
          %s274 = sphi 0, %s278
          %p275 = scmp.ge.s32.totalorder %s274, 2
        $region142: #{tpu_custom_call.1} parent=11 // loop_header_branch
          %277 = sbr.rel (%p275) target = $region146
        $region143: #{tpu_custom_call.1} parent=11 // loop_body
          %s279 = smul.u32 1, 1
          %s280 = sshll.u32 %s279, 4
          %281 = dma.done [#allocation2], %s280
          %s282 = sshll.u32 %s279, 4
          %283 = dma.done [#allocation2], %s282
          %s284 = sshll.u32 %s279, 4
          %285 = dma.done [#allocation2], %s284
          %s286 = sshll.u32 %s279, 4
          %287 = dma.done [#allocation2], %s286
        $region144: #{tpu_custom_call.1} parent=11 // loop_footer
          %s278 = sadd.s32 1, %s274
        $region145: #{tpu_custom_call.1} parent=11 // loop_footer_branch
          %273 = sbr.rel target = $region141
        $region146: #{tpu_custom_call.1} parent=11 // loop_exit
          _
        %s288 = sand.u32 %s26, 1
        %s289 = scalar_lea.sflag [#allocation6], %s288
        %s290 = sand.u32 %s26, 1
        %s291 = smul.addr %s290, 8
        %s292 = scalar_lea.vmem [#allocation5], %s291
        // Predicated region
        $region147: #{tpu_custom_call.1} parent=11 // pred_check
          %p293 = pneg %p32
        $region148: #{tpu_custom_call.1} parent=11 // pred_check_branch
          %295 = sbr.rel (%p293) target = $region150
        $region149: #{tpu_custom_call.1} parent=11 // pred_region
          %s297 = ssub.s32 128, 128
          %298 = vsyncadd %s289, %s297
          %s299 = smul.addr %s17, 128
          %s300 = scalar_lea.hbm %s2, %s299
          %s302 = sshll.u32 %s292, 4
          %s303 = int_to_ptr.vmem [resolvable:$true] %s302
          %305 = dma.vmem_to_hbm [thread:$0]  %s303, 128, %s300, %s289
        $region150: #{tpu_custom_call.1} parent=11 // pred_fallthru
          _
      $region12: #{tpu_custom_call.1} parent=5 // pred_fallthru
        _
      %p306 = scmp.le.s32.totalorder 1, %s17
      // Predicated region
      $region151: #{tpu_custom_call.1} parent=5 // pred_check
        %p307 = pneg %p306
      $region152: #{tpu_custom_call.1} parent=5 // pred_check_branch
        %309 = sbr.rel (%p307) target = $region154
      $region153: #{tpu_custom_call.1} parent=5 // pred_region
        %s310 = ssub.s32 %s17, 1
        // Predicated region
        $region155: #{tpu_custom_call.1} parent=153 // pred_check
          %p311 = pneg %p38
        $region156: #{tpu_custom_call.1} parent=153 // pred_check_branch
          %313 = sbr.rel (%p311) target = $region158
        $region157: #{tpu_custom_call.1} parent=153 // pred_region
          %s314 = sand.u32 %s29, 1
          %s315 = scalar_lea.sflag [#allocation6], %s314
          %s316 = sand.u32 %s29, 1
          %s317 = smul.addr %s316, 8
          %s318 = scalar_lea.vmem [#allocation5], %s317
          %319 = dma.done %s315, 128
        $region158: #{tpu_custom_call.1} parent=153 // pred_fallthru
          _
      $region154: #{tpu_custom_call.1} parent=5 // pred_fallthru
        _
    $region6: #{tpu_custom_call.1} parent=1 // loop_footer
      %s21 = sadd.s32 1, %s17
    $region7: #{tpu_custom_call.1} parent=1 // loop_footer_branch
      %16 = sbr.rel target = $region3
    $region8: #{tpu_custom_call.1} parent=1 // loop_exit
      _
    %320 = vsyncpa [#allocation6], 1
    %s321 = scalar_lea.sflag [#allocation6], 1
    %322 = vsyncpa %s321, 1
  %323 = vsyncmov [#allocation2]
  %s324 = vpop.sfrf %323
  %p325 = scmp.eq.s32.totalorder %s324, 0
  %p326 = pneg %p325
  %328 = shalt.err (%p326)

</llo_original>
